<compile_context>
chip_gen: v7x
topology: tpu7x:2x2x1
jax: 0.10.0
libtpu: 0.0.40
codegen_flags: <defaults>
</compile_context>

<pallas_src>
import math
from functools import partial

import jax
import jax.numpy as jnp
from jax.experimental import pallas as pl
from jax.experimental.pallas import tpu as pltpu


def batch_mlp_kernel(x_ref, w0_ref, b0_ref, w1_ref, b1_ref, w2_ref, b2_ref,
                     o_ref):
    """One grid step: slot k = program_id(0), rows m-tile = program_id(1).

    x_ref : (1, tm, Din)   streamed activation tile (compute dtype, e.g. bf16)
    w*_ref: (K, in, out)   resident weights (compute dtype)
    b*_ref: (K, 1, out)    resident biases  (f32)
    o_ref : (1, tm, Hout)  streamed output tile
    """
    k = pl.program_id(0)
    x = x_ref[0]                                               # (tm, Din)

    # layer 0: x @ W0[k] + b0[k], ReLU   (f32 accumulate, f32 elementwise)
    h = jnp.dot(x, w0_ref[k], preferred_element_type=jnp.float32) + b0_ref[k]
    h = jnp.maximum(h, 0.0)

    # layer 1
    h = jnp.dot(h.astype(w1_ref.dtype), w1_ref[k],
                preferred_element_type=jnp.float32) + b1_ref[k]
    h = jnp.maximum(h, 0.0)

    # final layer (activate_final = False -> no activation)
    h = jnp.dot(h.astype(w2_ref.dtype), w2_ref[k],
                preferred_element_type=jnp.float32) + b2_ref[k]

    # TODO(synk): Hout < 128 lanes forces masked partial stores; a lane-dense
    # output slab would help only if the consumer accepts a padded layout.
    o_ref[0] = h.astype(o_ref.dtype)


def _batch_mlp_pallas_kmaj(xk, params, *, tm_target=512,
                           compute_dtype=jnp.bfloat16):
    """Transpose-free path: xk is already (K, M, Din); returns (K, M, Hout)."""
    K, M, Din = xk.shape
    w0t, b0, w1t, b1, w2t, b2 = params
    H0, H1, Hout = w0t.shape[-1], w1t.shape[-1], w2t.shape[-1]
    out_dtype = xk.dtype

    # Cast streamed / MXU operands to the compute dtype; biases stay f32.
    xk_c = xk.astype(compute_dtype)
    w0c = w0t.astype(compute_dtype)
    w1c = w1t.astype(compute_dtype)
    w2c = w2t.astype(compute_dtype)
    b0r = b0.astype(jnp.float32).reshape(K, 1, H0)
    b1r = b1.astype(jnp.float32).reshape(K, 1, H1)
    b2r = b2.astype(jnp.float32).reshape(K, 1, Hout)

    # Row tile: whole M when small, otherwise 512 rows (multiple of 8 sublanes
    # and of the 256-row MXU pass).  Double-buffered footprint stays in the KB
    # range for these feature widths, well under v7x's 64 MiB VMEM.
    tm = M if M <= tm_target else tm_target
    grid = (K, pl.cdiv(M, tm))

    resident = lambda k, m: (0, 0, 0)   # weights/biases: DMA'd once, kept in VMEM

    out = pl.pallas_call(
        batch_mlp_kernel,
        out_shape=jax.ShapeDtypeStruct((K, M, Hout), out_dtype),
        grid_spec=pltpu.PrefetchScalarGridSpec(
            num_scalar_prefetch=0,
            grid=grid,
            in_specs=[
                # streamed activations; if DMA is exposed on v5e, add
                # pipeline_mode=pl.Buffered(3) here.
                pl.BlockSpec((1, tm, Din), lambda k, m: (k, m, 0)),
                # resident weights / biases (full-K blocks, constant index_map)
                pl.BlockSpec((K, Din, H0), resident),
                pl.BlockSpec((K, 1, H0), resident),
                pl.BlockSpec((K, H0, H1), resident),
                pl.BlockSpec((K, 1, H1), resident),
                pl.BlockSpec((K, H1, Hout), resident),
                pl.BlockSpec((K, 1, Hout), resident),
            ],
            out_specs=pl.BlockSpec((1, tm, Hout), lambda k, m: (k, m, 0)),
        ),
        compiler_params=pltpu.CompilerParams(
            dimension_semantics=("parallel", "parallel")),
    )(xk_c, w0c, b0r, w1c, b1r, w2c, b2r)
    return out


@partial(jax.jit, static_argnames=("tm_target", "compute_dtype"))
def batch_mlp_pallas(x, params, *, tm_target=512, compute_dtype=jnp.bfloat16):
    """x: [t1, ..., tn, K, Din]; params: (w0T, b0, w1T, b1, w2T, b2)
    with wT_l: [K, in_l, out_l], b_l: [K, out_l].  Returns [t1..tn, K, Hout].
    """
    *lead, K, Din = x.shape
    M = int(math.prod(lead)) if lead else 1
    # Layout plumbing to the kernel's (K, M, .) compute layout.  Keeping the
    # whole wrapper jitted lets XLA fold these copies where possible; callers
    # that can consume (K, M, .) should use _batch_mlp_pallas_kmaj directly.
    xk = jnp.transpose(x.reshape(M, K, Din), (1, 0, 2))            # (K, M, Din)
    out = _batch_mlp_pallas_kmaj(xk, params, tm_target=tm_target,
                                 compute_dtype=compute_dtype)      # (K, M, Hout)
    Hout = out.shape[-1]
    return jnp.transpose(out, (1, 0, 2)).reshape(*lead, K, Hout)


def init_batch_linear(key, K, in_dim, out_dim):
    """Truncated-normal weight init with fan_in scaling (as in the module),
    zero bias.  Weight stored pre-transposed: [K, in_dim, out_dim]."""
    w = jax.random.truncated_normal(
        key, -2.0, 2.0, (K, out_dim, in_dim), dtype=jnp.float32)
    w = w / jnp.sqrt(jnp.float32(in_dim))
    b = jnp.zeros((K, out_dim), dtype=jnp.float32)
    return jnp.transpose(w, (0, 2, 1)), b


def batch_mlp_reference(x, params):
    """Pure-JAX reference of BatchMLP.forward (activate_final=False)."""
    w0t, b0, w1t, b1, w2t, b2 = params
    h = jnp.einsum("...ki,kio->...ko", x, w0t) + b0
    h = jax.nn.relu(h)
    h = jnp.einsum("...ki,kio->...ko", h, w1t) + b1
    h = jax.nn.relu(h)
    h = jnp.einsum("...ki,kio->...ko", h, w2t) + b2
    return h


if __name__ == "__main__":
    # BatchMLP(in_dim=16, n_hiddens=[32, 32, 8], indep_dims=[4])
    # -> interim layers: BatchLinear(16,32), BatchLinear(32,32)
    # -> final layer:    BatchLinear(32, 8)
    T1, T2, K, DIN = 2, 8, 4, 16
    H0, H1, HOUT = 32, 32, 8

    key = jax.random.PRNGKey(0)
    kx, k0, k1, k2, kb0, kb1, kb2 = jax.random.split(key, 7)

    x = jax.random.normal(kx, (T1, T2, K, DIN), dtype=jnp.float32)

    w0t, b0 = init_batch_linear(k0, K, DIN, H0)
    w1t, b1 = init_batch_linear(k1, K, H0, H1)
    w2t, b2 = init_batch_linear(k2, K, H1, HOUT)
    # The module zero-inits biases; use small random biases in the test so the
    # bias-broadcast path is actually exercised numerically.
    b0 = 0.1 * jax.random.normal(kb0, (K, H0), dtype=jnp.float32)
    b1 = 0.1 * jax.random.normal(kb1, (K, H1), dtype=jnp.float32)
    b2 = 0.1 * jax.random.normal(kb2, (K, HOUT), dtype=jnp.float32)
    params = (w0t, b0, w1t, b1, w2t, b2)

    y_ref = batch_mlp_reference(x, params)

    # 1) exact path: f32 compute inside the kernel (tight tolerance).
    y_f32 = jax.block_until_ready(
        batch_mlp_pallas(x, params, compute_dtype=jnp.float32))
    assert y_f32.shape == (T1, T2, K, HOUT), y_f32.shape
    assert jnp.allclose(y_f32, y_ref, atol=2e-3, rtol=2e-3), (
        float(jnp.max(jnp.abs(y_f32 - y_ref))))

    # 2) default fast path: bf16 streamed operands, f32 accumulation.
    y = jax.block_until_ready(batch_mlp_pallas(x, params))
    assert y.shape == (T1, T2, K, HOUT), y.shape
    assert jnp.allclose(y, y_ref, atol=5e-2, rtol=5e-2), (
        float(jnp.max(jnp.abs(y - y_ref))))

    print("KERNEL_OK")
</pallas_src>

<mosaic_0001>
module attributes {stable_mosaic.version = 11 : i64} {
  func.func @batch_mlp_kernel(%arg0: i32, %arg1: i32, %arg2: memref<1x16x16xf32, #tpu.memory_space<vmem>>, %arg3: memref<4x16x32xf32, #tpu.memory_space<vmem>>, %arg4: memref<4x1x32xf32, #tpu.memory_space<vmem>>, %arg5: memref<4x32x32xf32, #tpu.memory_space<vmem>>, %arg6: memref<4x1x32xf32, #tpu.memory_space<vmem>>, %arg7: memref<4x32x8xf32, #tpu.memory_space<vmem>>, %arg8: memref<4x1x8xf32, #tpu.memory_space<vmem>>, %arg9: memref<1x16x8xf32, #tpu.memory_space<vmem>>) attributes {dimension_semantics = [#tpu.dimension_semantics<parallel>, #tpu.dimension_semantics<parallel>], iteration_bounds = array<i64: 4, 1>, scalar_prefetch = 0 : i64, scratch_operands = 0 : i64, tpu.core_type = #tpu.core_type<tc>, window_params = [{transform_indices = @transform_0, window_bounds = array<i64: 1, 16, 16>}, {pipeline_mode = #tpu.pipeline_mode<synchronous>, transform_indices = @transform_1, window_bounds = array<i64: 4, 16, 32>}, {pipeline_mode = #tpu.pipeline_mode<synchronous>, transform_indices = @transform_2, window_bounds = array<i64: 4, 1, 32>}, {pipeline_mode = #tpu.pipeline_mode<synchronous>, transform_indices = @transform_3, window_bounds = array<i64: 4, 32, 32>}, {pipeline_mode = #tpu.pipeline_mode<synchronous>, transform_indices = @transform_4, window_bounds = array<i64: 4, 1, 32>}, {pipeline_mode = #tpu.pipeline_mode<synchronous>, transform_indices = @transform_5, window_bounds = array<i64: 4, 32, 8>}, {pipeline_mode = #tpu.pipeline_mode<synchronous>, transform_indices = @transform_6, window_bounds = array<i64: 4, 1, 8>}, {transform_indices = @transform_7, window_bounds = array<i64: 1, 16, 8>}]} {
    %c0 = arith.constant 0 : index
    %c0_0 = arith.constant 0 : index
    %c0_1 = arith.constant 0 : index
    %0 = vector.load %arg2[%c0, %c0_0, %c0_1] : memref<1x16x16xf32, #tpu.memory_space<vmem>>, vector<1x16x16xf32>
    %1 = vector.shape_cast %0 : vector<1x16x16xf32> to vector<16x16xf32>
    %2 = arith.index_cast %arg0 : i32 to index
    %c0_2 = arith.constant 0 : index
    %c0_3 = arith.constant 0 : index
    %3 = vector.load %arg3[%2, %c0_2, %c0_3] : memref<4x16x32xf32, #tpu.memory_space<vmem>>, vector<1x16x32xf32>
    %4 = vector.shape_cast %3 : vector<1x16x32xf32> to vector<16x32xf32>
    %cst = arith.constant dense<0.000000e+00> : vector<16x32xf32>
    %5 = tpu.matmul %1, %4, %cst {dimension_numbers = #tpu.dot_dimension_numbers<[1], [0], [0], [1], [0, 0, 1, 1], [], []>} : vector<16x16xf32>, vector<16x32xf32>, vector<16x32xf32> -> vector<16x32xf32>
    %6 = arith.index_cast %arg0 : i32 to index
    %c0_4 = arith.constant 0 : index
    %c0_5 = arith.constant 0 : index
    %7 = vector.load %arg4[%6, %c0_4, %c0_5] : memref<4x1x32xf32, #tpu.memory_space<vmem>>, vector<1x1x32xf32>
    %8 = vector.shape_cast %7 : vector<1x1x32xf32> to vector<1x32xf32>
    %9 = vector.broadcast %8 : vector<1x32xf32> to vector<16x32xf32>
    %10 = arith.addf %5, %9 : vector<16x32xf32>
    %cst_6 = arith.constant 0.000000e+00 : f32
    %11 = vector.broadcast %cst_6 : f32 to vector<16x32xf32>
    %12 = arith.maximumf %10, %11 : vector<16x32xf32>
    %13 = arith.index_cast %arg0 : i32 to index
    %c0_7 = arith.constant 0 : index
    %c0_8 = arith.constant 0 : index
    %14 = vector.load %arg5[%13, %c0_7, %c0_8] : memref<4x32x32xf32, #tpu.memory_space<vmem>>, vector<1x32x32xf32>
    %15 = vector.shape_cast %14 : vector<1x32x32xf32> to vector<32x32xf32>
    %cst_9 = arith.constant dense<0.000000e+00> : vector<16x32xf32>
    %16 = tpu.matmul %12, %15, %cst_9 {dimension_numbers = #tpu.dot_dimension_numbers<[1], [0], [0], [1], [0, 0, 1, 1], [], []>} : vector<16x32xf32>, vector<32x32xf32>, vector<16x32xf32> -> vector<16x32xf32>
    %17 = arith.index_cast %arg0 : i32 to index
    %c0_10 = arith.constant 0 : index
    %c0_11 = arith.constant 0 : index
    %18 = vector.load %arg6[%17, %c0_10, %c0_11] : memref<4x1x32xf32, #tpu.memory_space<vmem>>, vector<1x1x32xf32>
    %19 = vector.shape_cast %18 : vector<1x1x32xf32> to vector<1x32xf32>
    %20 = vector.broadcast %19 : vector<1x32xf32> to vector<16x32xf32>
    %21 = arith.addf %16, %20 : vector<16x32xf32>
    %cst_12 = arith.constant 0.000000e+00 : f32
    %22 = vector.broadcast %cst_12 : f32 to vector<16x32xf32>
    %23 = arith.maximumf %21, %22 : vector<16x32xf32>
    %24 = arith.index_cast %arg0 : i32 to index
    %c0_13 = arith.constant 0 : index
    %c0_14 = arith.constant 0 : index
    %25 = vector.load %arg7[%24, %c0_13, %c0_14] : memref<4x32x8xf32, #tpu.memory_space<vmem>>, vector<1x32x8xf32>
    %26 = vector.shape_cast %25 : vector<1x32x8xf32> to vector<32x8xf32>
    %cst_15 = arith.constant dense<0.000000e+00> : vector<16x8xf32>
    %27 = tpu.matmul %23, %26, %cst_15 {dimension_numbers = #tpu.dot_dimension_numbers<[1], [0], [0], [1], [0, 0, 1, 1], [], []>} : vector<16x32xf32>, vector<32x8xf32>, vector<16x8xf32> -> vector<16x8xf32>
    %28 = arith.index_cast %arg0 : i32 to index
    %c0_16 = arith.constant 0 : index
    %c0_17 = arith.constant 0 : index
    %29 = vector.load %arg8[%28, %c0_16, %c0_17] : memref<4x1x8xf32, #tpu.memory_space<vmem>>, vector<1x1x8xf32>
    %30 = vector.shape_cast %29 : vector<1x1x8xf32> to vector<1x8xf32>
    %31 = vector.broadcast %30 : vector<1x8xf32> to vector<16x8xf32>
    %32 = arith.addf %27, %31 : vector<16x8xf32>
    %c0_18 = arith.constant 0 : index
    %c0_19 = arith.constant 0 : index
    %c0_20 = arith.constant 0 : index
    %33 = vector.load %arg9[%c0_18, %c0_19, %c0_20] : memref<1x16x8xf32, #tpu.memory_space<vmem>>, vector<1x16x8xf32>
    %34 = vector.shape_cast %33 : vector<1x16x8xf32> to vector<16x8xf32>
    %35 = vector.shape_cast %32 : vector<16x8xf32> to vector<1x16x8xf32>
    tpu.vector_store %arg9[%c0_18, %c0_19, %c0_20], %35 {strides = array<i32>} : memref<1x16x8xf32, #tpu.memory_space<vmem>>, vector<1x16x8xf32>,
    return
  }
  func.func @transform_0(%arg0: i32, %arg1: i32) -> (i32, i32, i32) {
    %c0_i32 = arith.constant 0 : i32
    %c0_i32_0 = arith.constant 0 : i32
    return %arg0, %arg1, %c0_i32 : i32, i32, i32
  }
  func.func @transform_1(%arg0: i32, %arg1: i32) -> (i32, i32, i32) {
    %c0_i32 = arith.constant 0 : i32
    %c0_i32_0 = arith.constant 0 : i32
    %c0_i32_1 = arith.constant 0 : i32
    %c0_i32_2 = arith.constant 0 : i32
    return %c0_i32, %c0_i32_0, %c0_i32_1 : i32, i32, i32
  }
  func.func @transform_2(%arg0: i32, %arg1: i32) -> (i32, i32, i32) {
    %c0_i32 = arith.constant 0 : i32
    %c0_i32_0 = arith.constant 0 : i32
    %c0_i32_1 = arith.constant 0 : i32
    %c0_i32_2 = arith.constant 0 : i32
    return %c0_i32, %c0_i32_0, %c0_i32_1 : i32, i32, i32
  }
  func.func @transform_3(%arg0: i32, %arg1: i32) -> (i32, i32, i32) {
    %c0_i32 = arith.constant 0 : i32
    %c0_i32_0 = arith.constant 0 : i32
    %c0_i32_1 = arith.constant 0 : i32
    %c0_i32_2 = arith.constant 0 : i32
    return %c0_i32, %c0_i32_0, %c0_i32_1 : i32, i32, i32
  }
  func.func @transform_4(%arg0: i32, %arg1: i32) -> (i32, i32, i32) {
    %c0_i32 = arith.constant 0 : i32
    %c0_i32_0 = arith.constant 0 : i32
    %c0_i32_1 = arith.constant 0 : i32
    %c0_i32_2 = arith.constant 0 : i32
    return %c0_i32, %c0_i32_0, %c0_i32_1 : i32, i32, i32
  }
  func.func @transform_5(%arg0: i32, %arg1: i32) -> (i32, i32, i32) {
    %c0_i32 = arith.constant 0 : i32
    %c0_i32_0 = arith.constant 0 : i32
    %c0_i32_1 = arith.constant 0 : i32
    %c0_i32_2 = arith.constant 0 : i32
    return %c0_i32, %c0_i32_0, %c0_i32_1 : i32, i32, i32
  }
  func.func @transform_6(%arg0: i32, %arg1: i32) -> (i32, i32, i32) {
    %c0_i32 = arith.constant 0 : i32
    %c0_i32_0 = arith.constant 0 : i32
    %c0_i32_1 = arith.constant 0 : i32
    %c0_i32_2 = arith.constant 0 : i32
    return %c0_i32, %c0_i32_0, %c0_i32_1 : i32, i32, i32
  }
  func.func @transform_7(%arg0: i32, %arg1: i32) -> (i32, i32, i32) {
    %c0_i32 = arith.constant 0 : i32
    %c0_i32_0 = arith.constant 0 : i32
    return %arg0, %arg1, %c0_i32 : i32, i32, i32
  }
}

</mosaic_0001>

<llo_original>
// kernel: batch_mlp_pallas.1
$region0: #{batch_mlp_pallas.1}
  #allocation0 [shape = 'u32[]', space=smem, size = 0x4, offset = 0x4, fixed_abs, tag = 'smem constant byte address 0x4 - core index']
  #allocation1 [shape = 'u32[144,128]{1,0:T(1,128)}', space=vmem, size = 0x12000, scoped, tag = 'internal scratch']
  %s0 = inlined_call_operand.vmem [shape: f32[4,16,16], index: 0, kind: input, shape index: {}]
  %s1 = inlined_call_operand.vmem [shape: f32[4,16,32], index: 1, kind: input, shape index: {}]
  %s2 = inlined_call_operand.vmem [shape: f32[4,1,32], index: 2, kind: input, shape index: {}]
  %s3 = inlined_call_operand.vmem [shape: f32[4,32,32], index: 3, kind: input, shape index: {}]
  %s4 = inlined_call_operand.vmem [shape: f32[4,1,32], index: 4, kind: input, shape index: {}]
  %s5 = inlined_call_operand.vmem [shape: f32[4,32,8], index: 5, kind: input, shape index: {}]
  %s6 = inlined_call_operand.vmem [shape: f32[4,1,8], index: 6, kind: input, shape index: {}]
  %s7 = inlined_call_operand.vmem [shape: f32[4,16,8], index: 7, kind: output, shape index: {}]
  %s8 = sld [smem:[#allocation0]]
  $region61: #{batch_mlp_pallas.1} parent=0
    _
  %s10 = ssub.s32 1, %s8
  %s11 = scalar_select 0, %s10, %s8
  loop: start=0, step=1, limit=6
  $region2: #{batch_mlp_pallas.1} parent=0 // loop_pre_header
    _
  $region3: #{batch_mlp_pallas.1} parent=0 // loop_header
    %s13 = sphi 0, %s17
    %p14 = scmp.ge.s32.totalorder %s13, 6
    %s20 = sphi 0, %s32
    %s21 = sphi 0, %s28
    %s22 = sphi 0, %s20
    %s23 = sphi 0, %s21
    %s24 = sphi 0, %s22
    %s25 = sphi 0, %s23
    %s37 = sphi 0, %s39
    %s40 = sphi 0, %s37
    %s41 = sphi 0, %s40
    %s57 = sphi 0, %s41
    %s61 = sphi 0, %s61
    %s63 = sphi 0, %s61
    %s64 = sphi 0, %s63
    %s78 = sphi 0, %s64
    %s82 = sphi 0, %s82
    %s84 = sphi 0, %s82
    %s85 = sphi 0, %s84
    %s99 = sphi 0, %s85
    %s103 = sphi 0, %s103
    %s105 = sphi 0, %s103
    %s106 = sphi 0, %s105
    %s120 = sphi 0, %s106
    %s124 = sphi 0, %s124
    %s126 = sphi 0, %s124
    %s127 = sphi 0, %s126
    %s141 = sphi 0, %s127
    %s145 = sphi 0, %s145
    %s147 = sphi 0, %s145
    %s148 = sphi 0, %s147
    %s162 = sphi 0, %s148
    %s166 = sphi 0, %s166
    %s168 = sphi 0, %s166
    %s169 = sphi 0, %s168
    %s183 = sphi 0, %s169
    %s191 = sphi 0, %s193
    %s194 = sphi 0, %s191
    %s195 = sphi 0, %s194
    %s211 = sphi 0, %s195
  $region4: #{batch_mlp_pallas.1} parent=0 // loop_header_branch
    %16 = sbr.rel (%p14) target = $region8
  $region5: #{batch_mlp_pallas.1} parent=0 // loop_body
    %s18 = ssub.s32 %s13, 1
    %s19 = ssub.s32 %s13, 2
    %s26 = sadd.s32 1, %s21
    %p27 = scmp.ge.s32.totalorder %s26, 1
    %s28 = scalar_select %p27, 0, %s26
    %s29 = sadd.s32 1, %s20
    %s30 = scalar_select %p27, %s29, %s20
    %p31 = scmp.ge.s32.totalorder %s30, 4
    %s32 = scalar_select %p31, 0, %s30
    %s33 = ssub.s32 %s20, %s32
    %s34 = ssub.s32 %s21, %s28
    %s35 = sor.u32 %s33, %s34
    %p36 = scmp.eq.s32.totalorder %s35, 0
    %s38 = sadd.s32 %s37, 1
    %s39 = scalar_select %p36, %s37, %s38
    %p42 = pneg %p36
    %p43 = scmp.eq.s32.totalorder %s13, 3
    %p44 = por %p42, %p43
    %p45 = scmp.ne.s32.totalorder %s37, %s40
    %p46 = scmp.eq.s32.totalorder %s13, 0
    %p47 = por %p45, %p46
    %p48 = scmp.ne.s32.totalorder %s37, %s40
    %p49 = scmp.eq.s32.totalorder %s18, 3
    %p50 = por %p48, %p49
    %p51 = scmp.ne.s32.totalorder %s40, %s41
    %p52 = scmp.eq.s32.totalorder %s18, 0
    %p53 = por %p51, %p52
    %p54 = scmp.ne.s32.totalorder %s40, %s41
    %p55 = scmp.eq.s32.totalorder %s19, 3
    %p56 = por %p54, %p55
    %p58 = scmp.ne.s32.totalorder %s41, %s57
    %p59 = scmp.eq.s32.totalorder %s19, 0
    %p60 = por %p58, %p59
    %s62 = sadd.s32 %s61, 1
    %p65 = scmp.eq.s32.totalorder %s13, 3
    %p66 = scmp.ne.s32.totalorder %s61, %s63
    %p67 = scmp.eq.s32.totalorder %s13, 0
    %p68 = por %p66, %p67
    %p69 = scmp.ne.s32.totalorder %s61, %s63
    %p70 = scmp.eq.s32.totalorder %s18, 3
    %p71 = por %p69, %p70
    %p72 = scmp.ne.s32.totalorder %s63, %s64
    %p73 = scmp.eq.s32.totalorder %s18, 0
    %p74 = por %p72, %p73
    %p75 = scmp.ne.s32.totalorder %s63, %s64
    %p76 = scmp.eq.s32.totalorder %s19, 3
    %p77 = por %p75, %p76
    %p79 = scmp.ne.s32.totalorder %s64, %s78
    %p80 = scmp.eq.s32.totalorder %s19, 0
    %p81 = por %p79, %p80
    %s83 = sadd.s32 %s82, 1
    %p86 = scmp.eq.s32.totalorder %s13, 3
    %p87 = scmp.ne.s32.totalorder %s82, %s84
    %p88 = scmp.eq.s32.totalorder %s13, 0
    %p89 = por %p87, %p88
    %p90 = scmp.ne.s32.totalorder %s82, %s84
    %p91 = scmp.eq.s32.totalorder %s18, 3
    %p92 = por %p90, %p91
    %p93 = scmp.ne.s32.totalorder %s84, %s85
    %p94 = scmp.eq.s32.totalorder %s18, 0
    %p95 = por %p93, %p94
    %p96 = scmp.ne.s32.totalorder %s84, %s85
    %p97 = scmp.eq.s32.totalorder %s19, 3
    %p98 = por %p96, %p97
    %p100 = scmp.ne.s32.totalorder %s85, %s99
    %p101 = scmp.eq.s32.totalorder %s19, 0
    %p102 = por %p100, %p101
    %s104 = sadd.s32 %s103, 1
    %p107 = scmp.eq.s32.totalorder %s13, 3
    %p108 = scmp.ne.s32.totalorder %s103, %s105
    %p109 = scmp.eq.s32.totalorder %s13, 0
    %p110 = por %p108, %p109
    %p111 = scmp.ne.s32.totalorder %s103, %s105
    %p112 = scmp.eq.s32.totalorder %s18, 3
    %p113 = por %p111, %p112
    %p114 = scmp.ne.s32.totalorder %s105, %s106
    %p115 = scmp.eq.s32.totalorder %s18, 0
    %p116 = por %p114, %p115
    %p117 = scmp.ne.s32.totalorder %s105, %s106
    %p118 = scmp.eq.s32.totalorder %s19, 3
    %p119 = por %p117, %p118
    %p121 = scmp.ne.s32.totalorder %s106, %s120
    %p122 = scmp.eq.s32.totalorder %s19, 0
    %p123 = por %p121, %p122
    %s125 = sadd.s32 %s124, 1
    %p128 = scmp.eq.s32.totalorder %s13, 3
    %p129 = scmp.ne.s32.totalorder %s124, %s126
    %p130 = scmp.eq.s32.totalorder %s13, 0
    %p131 = por %p129, %p130
    %p132 = scmp.ne.s32.totalorder %s124, %s126
    %p133 = scmp.eq.s32.totalorder %s18, 3
    %p134 = por %p132, %p133
    %p135 = scmp.ne.s32.totalorder %s126, %s127
    %p136 = scmp.eq.s32.totalorder %s18, 0
    %p137 = por %p135, %p136
    %p138 = scmp.ne.s32.totalorder %s126, %s127
    %p139 = scmp.eq.s32.totalorder %s19, 3
    %p140 = por %p138, %p139
    %p142 = scmp.ne.s32.totalorder %s127, %s141
    %p143 = scmp.eq.s32.totalorder %s19, 0
    %p144 = por %p142, %p143
    %s146 = sadd.s32 %s145, 1
    %p149 = scmp.eq.s32.totalorder %s13, 3
    %p150 = scmp.ne.s32.totalorder %s145, %s147
    %p151 = scmp.eq.s32.totalorder %s13, 0
    %p152 = por %p150, %p151
    %p153 = scmp.ne.s32.totalorder %s145, %s147
    %p154 = scmp.eq.s32.totalorder %s18, 3
    %p155 = por %p153, %p154
    %p156 = scmp.ne.s32.totalorder %s147, %s148
    %p157 = scmp.eq.s32.totalorder %s18, 0
    %p158 = por %p156, %p157
    %p159 = scmp.ne.s32.totalorder %s147, %s148
    %p160 = scmp.eq.s32.totalorder %s19, 3
    %p161 = por %p159, %p160
    %p163 = scmp.ne.s32.totalorder %s148, %s162
    %p164 = scmp.eq.s32.totalorder %s19, 0
    %p165 = por %p163, %p164
    %s167 = sadd.s32 %s166, 1
    %p170 = scmp.eq.s32.totalorder %s13, 3
    %p171 = scmp.ne.s32.totalorder %s166, %s168
    %p172 = scmp.eq.s32.totalorder %s13, 0
    %p173 = por %p171, %p172
    %p174 = scmp.ne.s32.totalorder %s166, %s168
    %p175 = scmp.eq.s32.totalorder %s18, 3
    %p176 = por %p174, %p175
    %p177 = scmp.ne.s32.totalorder %s168, %s169
    %p178 = scmp.eq.s32.totalorder %s18, 0
    %p179 = por %p177, %p178
    %p180 = scmp.ne.s32.totalorder %s168, %s169
    %p181 = scmp.eq.s32.totalorder %s19, 3
    %p182 = por %p180, %p181
    %p184 = scmp.ne.s32.totalorder %s169, %s183
    %p185 = scmp.eq.s32.totalorder %s19, 0
    %p186 = por %p184, %p185
    %s187 = ssub.s32 %s20, %s32
    %s188 = ssub.s32 %s21, %s28
    %s189 = sor.u32 %s187, %s188
    %p190 = scmp.eq.s32.totalorder %s189, 0
    %s192 = sadd.s32 %s191, 1
    %s193 = scalar_select %p190, %s191, %s192
    %p196 = pneg %p190
    %p197 = scmp.eq.s32.totalorder %s13, 3
    %p198 = por %p196, %p197
    %p199 = scmp.ne.s32.totalorder %s191, %s194
    %p200 = scmp.eq.s32.totalorder %s13, 0
    %p201 = por %p199, %p200
    %p202 = scmp.ne.s32.totalorder %s191, %s194
    %p203 = scmp.eq.s32.totalorder %s18, 3
    %p204 = por %p202, %p203
    %p205 = scmp.ne.s32.totalorder %s194, %s195
    %p206 = scmp.eq.s32.totalorder %s18, 0
    %p207 = por %p205, %p206
    %p208 = scmp.ne.s32.totalorder %s194, %s195
    %p209 = scmp.eq.s32.totalorder %s19, 3
    %p210 = por %p208, %p209
    %p212 = scmp.ne.s32.totalorder %s195, %s211
    %p213 = scmp.eq.s32.totalorder %s19, 0
    %p214 = por %p212, %p213
    %p215 = scmp.le.s32.totalorder 1, %s13
    %p216 = scmp.lt.s32.totalorder %s13, 5
    %p217 = pnand %p215, %p216
    %p218 = pneg %p217
    // Predicated region
    $region9: #{batch_mlp_pallas.1} parent=5 // pred_check
      _
    $region10: #{batch_mlp_pallas.1} parent=5 // pred_check_branch
      %220 = sbr.rel (%p217) target = $region12
    $region11: #{batch_mlp_pallas.1} parent=5 // pred_region
      %s221 = ssub.s32 %s13, 1
      // Predicated region
      $region13: #{batch_mlp_pallas.1} parent=11 // pred_check
        %p222 = pneg %p74
      $region14: #{batch_mlp_pallas.1} parent=11 // pred_check_branch
        %224 = sbr.rel (%p222) target = $region16
      $region15: #{batch_mlp_pallas.1} parent=11 // pred_region
        _
      $region16: #{batch_mlp_pallas.1} parent=11 // pred_fallthru
        _
      // Predicated region
      $region17: #{batch_mlp_pallas.1} parent=11 // pred_check
        %p225 = pneg %p95
      $region18: #{batch_mlp_pallas.1} parent=11 // pred_check_branch
        %227 = sbr.rel (%p225) target = $region20
      $region19: #{batch_mlp_pallas.1} parent=11 // pred_region
        _
      $region20: #{batch_mlp_pallas.1} parent=11 // pred_fallthru
        _
      // Predicated region
      $region21: #{batch_mlp_pallas.1} parent=11 // pred_check
        %p228 = pneg %p116
      $region22: #{batch_mlp_pallas.1} parent=11 // pred_check_branch
        %230 = sbr.rel (%p228) target = $region24
      $region23: #{batch_mlp_pallas.1} parent=11 // pred_region
        _
      $region24: #{batch_mlp_pallas.1} parent=11 // pred_fallthru
        _
      // Predicated region
      $region25: #{batch_mlp_pallas.1} parent=11 // pred_check
        %p231 = pneg %p137
      $region26: #{batch_mlp_pallas.1} parent=11 // pred_check_branch
        %233 = sbr.rel (%p231) target = $region28
      $region27: #{batch_mlp_pallas.1} parent=11 // pred_region
        _
      $region28: #{batch_mlp_pallas.1} parent=11 // pred_fallthru
        _
      // Predicated region
      $region29: #{batch_mlp_pallas.1} parent=11 // pred_check
        %p234 = pneg %p158
      $region30: #{batch_mlp_pallas.1} parent=11 // pred_check_branch
        %236 = sbr.rel (%p234) target = $region32
      $region31: #{batch_mlp_pallas.1} parent=11 // pred_region
        _
      $region32: #{batch_mlp_pallas.1} parent=11 // pred_fallthru
        _
      // Predicated region
      $region33: #{batch_mlp_pallas.1} parent=11 // pred_check
        %p237 = pneg %p179
      $region34: #{batch_mlp_pallas.1} parent=11 // pred_check_branch
        %239 = sbr.rel (%p237) target = $region36
      $region35: #{batch_mlp_pallas.1} parent=11 // pred_region
        _
      $region36: #{batch_mlp_pallas.1} parent=11 // pred_fallthru
        _
    $region12: #{batch_mlp_pallas.1} parent=5 // pred_fallthru
      _
    %p240 = scmp.lt.s32.totalorder %s13, 4
    // Predicated region
    $region37: #{batch_mlp_pallas.1} parent=5 // pred_check
      %p241 = pneg %p240
    $region38: #{batch_mlp_pallas.1} parent=5 // pred_check_branch
      %243 = sbr.rel (%p241) target = $region40
    $region39: #{batch_mlp_pallas.1} parent=5 // pred_region
      // Predicated region
      $region41: #{batch_mlp_pallas.1} parent=39 // pred_check
        %p244 = pneg %p47
      $region42: #{batch_mlp_pallas.1} parent=39 // pred_check_branch
        %246 = sbr.rel (%p244) target = $region44
      $region43: #{batch_mlp_pallas.1} parent=39 // pred_region
        %s247 = smul.u32 2, %s21
        %p248 = scmp.lt.s32.totalorder %s20, 3
        %s249 = scalar_select %p248, %s20, 3
        %p250 = scmp.lt.s32.totalorder %s247, 1
        %s251 = scalar_select %p250, %s247, 1
        %s252 = smul.addr %s249, 2
        %s253 = sadd.s32 %s251, %s252
        %s254 = smul.addr %s253, 8
        %s255 = scalar_lea.vmem %s0, %s254
        %s256 = smul.u32 2, %s21
      $region44: #{batch_mlp_pallas.1} parent=39 // pred_fallthru
        _
    $region40: #{batch_mlp_pallas.1} parent=5 // pred_fallthru
      _
    %p257 = scmp.le.s32.totalorder 1, %s13
    %p258 = scmp.lt.s32.totalorder %s13, 5
    %p259 = pnand %p257, %p258
    %p260 = pneg %p259
    // Predicated region
    $region45: #{batch_mlp_pallas.1} parent=5 // pred_check
      _
    $region46: #{batch_mlp_pallas.1} parent=5 // pred_check_branch
      %262 = sbr.rel (%p259) target = $region48
    $region47: #{batch_mlp_pallas.1} parent=5 // pred_region
      %s263 = ssub.s32 %s13, 1
      %s264 = smul.u32 2, %s23
      %p265 = scmp.lt.s32.totalorder %s22, 3
      %s266 = scalar_select %p265, %s22, 3
      %p267 = scmp.lt.s32.totalorder %s264, 1
      %s268 = scalar_select %p267, %s264, 1
      %s269 = smul.addr %s266, 2
      %s270 = sadd.s32 %s268, %s269
      %s271 = smul.addr %s270, 8
      %s272 = scalar_lea.vmem %s0, %s271
      %p273 = pneg %p53
      %p274 = pneg %p50
      %p275 = pneg %p74
      %p276 = pneg %p71
      %p277 = pneg %p95
      %p278 = pneg %p92
      %p279 = pneg %p116
      %p280 = pneg %p113
      %p281 = pneg %p137
      %p282 = pneg %p134
      %p283 = pneg %p158
      %p284 = pneg %p155
      %p285 = pneg %p179
      %p286 = pneg %p176
      %p287 = pneg %p207
      %p288 = pneg %p204
      %s289 = smul.u32 2, %s23
      %p290 = scmp.lt.s32.totalorder %s22, 3
      %s291 = scalar_select %p290, %s22, 3
      %p292 = scmp.lt.s32.totalorder %s289, 1
      %s293 = scalar_select %p292, %s289, 1
      %s294 = smul.addr %s291, 2
      %s295 = sadd.s32 %s293, %s294
      %s296 = smul.addr %s295, 8
      %s297 = scalar_lea.vmem %s7, %s296
      %s298 = smul.u32 2, %s23
      %p299 = scmp.lt.s32.totalorder %s22, 3
      %s300 = scalar_select %p299, %s22, 3
      %p301 = scmp.lt.s32.totalorder %s298, 1
      %s302 = scalar_select %p301, %s298, 1
      %s303 = smul.addr %s300, 2
      %s304 = sadd.s32 %s302, %s303
      %s305 = smul.addr %s304, 8
      %s306 = scalar_lea.vmem %s0, %s305
      %s307 = smul.u32 2, %s23
      %s308 = smul.u32 2, %s23
      %p309 = scmp.lt.s32.totalorder %s22, 3
      %s310 = scalar_select %p309, %s22, 3
      %p311 = scmp.lt.s32.totalorder %s308, 1
      %s312 = scalar_select %p311, %s308, 1
      %s313 = smul.addr %s310, 2
      %s314 = sadd.s32 %s312, %s313
      %s315 = smul.addr %s314, 8
      %s316 = scalar_lea.vmem %s7, %s315
      %s317 = smul.u32 2, %s23
      %v318 = vld [vmem:[%s306] sm:$0xff]
      %v319 = vld [vmem:[%s306 + $0x8] sm:$0xff]
      %s320 = smul.u32 %s22, 16
      %s321 = scalar_lea.vmem %s1, %s320
      %v322 = vld [vmem:[%s321] sm:$0xff]
      %v323 = vld [vmem:[%s321 + $0x8] sm:$0xff]
      %s324 = scalar_lea.vmem %s2, %s22
      %v325 = vld [vmem:[%s324] sm:$0x1]
      %v327 = vlaneseq
      %v328 = vshrl.u32 %v327, 7
      %v329 = vsub.s32 0, %v328
      %v330 = vrot.slane %v325, %v329
      %vm332 = vcmask 130048
      %v334 = vsel %vm332, %v318, 0
      %v337 = vsel %vm332, %v319, 0
      %339 = vmatprep.subr.mxu0 0.0
      %340 = vmatpush1.msra.mxu0 %v322
      %341 = vmatprep.subr.mxu0 0.0
      %342 = vmatpush1.msra.mxu0 %v323
      %343 = vmatprep.subr.mxu0 0.0
      %344 = vmatpush1.msra.mxu0 0.0
      %345 = vmatprep.subr.mxu0 0.0
      %346 = vmatpush1.msra.mxu0 0.0
      %347 = vmatprep.subr.mxu0 0.0
      %348 = vmatpush1.msra.mxu0 0.0
      %349 = vmatprep.subr.mxu0 0.0
      %350 = vmatpush1.msra.mxu0 0.0
      %351 = vmatprep.subr.mxu0 0.0
      %352 = vmatpush1.msra.mxu0 0.0
      %353 = vmatprep.subr.mxu0 0.0
      %354 = vmatpush1.msra.mxu0 0.0
      %355 = vmatprep.subr.mxu0 0.0
      %356 = vmatpush1.msra.mxu0 0.0
      %357 = vmatprep.subr.mxu0 0.0
      %358 = vmatpush1.msra.mxu0 0.0
      %359 = vmatprep.subr.mxu0 0.0
      %360 = vmatpush1.msra.mxu0 0.0
      %361 = vmatprep.subr.mxu0 0.0
      %362 = vmatpush1.msra.mxu0 0.0
      %363 = vmatprep.subr.mxu0 0.0
      %364 = vmatpush1.msra.mxu0 0.0
      %365 = vmatprep.subr.mxu0 0.0
      %366 = vmatpush1.msra.mxu0 0.0
      %367 = vmatprep.subr.mxu0 0.0
      %368 = vmatpush1.msra.mxu0 0.0
      %369 = vmatprep.subr.mxu0 0.0
      %370 = vmatpush1.msra.mxu0 0.0
      %371 = vmatprep.subr.mxu0 0.0
      %372 = vmatpush1.msra.mxu0 0.0
      %373 = vmatprep.subr.mxu0 0.0
      %374 = vmatpush1.msra.mxu0 0.0
      %375 = vmatprep.subr.mxu0 0.0
      %376 = vmatpush1.msra.mxu0 0.0
      %377 = vmatprep.subr.mxu0 0.0
      %378 = vmatpush1.msra.mxu0 0.0
      %379 = vmatprep.subr.mxu0 0.0
      %380 = vmatpush1.msra.mxu0 0.0
      %381 = vmatprep.subr.mxu0 0.0
      %382 = vmatpush1.msra.mxu0 0.0
      %383 = vmatprep.subr.mxu0 0.0
      %384 = vmatpush1.msra.mxu0 0.0
      %385 = vmatprep.subr.mxu0 0.0
      %386 = vmatpush1.msra.mxu0 0.0
      %387 = vmatprep.subr.mxu0 0.0
      %388 = vmatpush1.msra.mxu0 0.0
      %389 = vmatprep.subr.mxu0 0.0
      %390 = vmatpush1.msra.mxu0 0.0
      %391 = vmatprep.subr.mxu0 0.0
      %392 = vmatpush1.msra.mxu0 0.0
      %393 = vmatprep.subr.mxu0 0.0
      %394 = vmatpush1.msra.mxu0 0.0
      %395 = vmatprep.subr.mxu0 0.0
      %396 = vmatpush1.msra.mxu0 0.0
      %397 = vmatprep.subr.mxu0 0.0
      %398 = vmatpush1.msra.mxu0 0.0
      %399 = vmatprep.subr.mxu0 0.0
      %400 = vmatpush1.msra.mxu0 0.0
      %401 = vmatprep.subr.mxu0 0.0
      %402 = vmatpush1.msra.mxu0 0.0
      %403 = vmatprep.mubr.f32.mxu0 0.0
      %404 = vmatmul.mubr.f32.gmra.mrb[0].mxu0 %v334
      %v405 = vpop.f32.mrb[0].mxu0
      %v406 = vadd.f32 %v330, %v405
      %v407 = vpop.f32.mrb[0].mxu0
      %408 = vmatprep.mubr.f32.mxu0 0.0
      %409 = vmatmul.mubr.f32.gmra.mrb[0].mxu0 %v337
      %v410 = vpop.f32.mrb[0].mxu0
      %v411 = vadd.f32 %v330, %v410
      %v412 = vpop.f32.mrb[0].mxu0
      %413 = vdwg.mxu0
      %v414 = vmax.f32 %v406, 0.0
      %v415 = vmax.f32 %v411, 0.0
      %s416 = smul.u32 %s22, 32
      %s417 = scalar_lea.vmem %s3, %s416
      %v418 = vld [vmem:[%s417] sm:$0xff]
      %v419 = vld [vmem:[%s417 + $0x8] sm:$0xff]
      %v420 = vld [vmem:[%s417 + $0x10] sm:$0xff]
      %v421 = vld [vmem:[%s417 + $0x18] sm:$0xff]
      %s422 = scalar_lea.vmem %s4, %s22
      %v423 = vld [vmem:[%s422] sm:$0x1]
      %v425 = vlaneseq
      %v426 = vshrl.u32 %v425, 7
      %v427 = vsub.s32 0, %v426
      %v428 = vrot.slane %v423, %v427
      %vm430 = vcmask 261120
      %v432 = vsel %vm430, %v414, 0
      %v435 = vsel %vm430, %v415, 0
      %437 = vmatprep.subr.mxu0 0.0
      %438 = vmatpush1.msra.mxu0 %v418
      %439 = vmatprep.subr.mxu0 0.0
      %440 = vmatpush1.msra.mxu0 %v419
      %441 = vmatprep.subr.mxu0 0.0
      %442 = vmatpush1.msra.mxu0 %v420
      %443 = vmatprep.subr.mxu0 0.0
      %444 = vmatpush1.msra.mxu0 %v421
      %445 = vmatprep.subr.mxu0 0.0
      %446 = vmatpush1.msra.mxu0 0.0
      %447 = vmatprep.subr.mxu0 0.0
      %448 = vmatpush1.msra.mxu0 0.0
      %449 = vmatprep.subr.mxu0 0.0
      %450 = vmatpush1.msra.mxu0 0.0
      %451 = vmatprep.subr.mxu0 0.0
      %452 = vmatpush1.msra.mxu0 0.0
      %453 = vmatprep.subr.mxu0 0.0
      %454 = vmatpush1.msra.mxu0 0.0
      %455 = vmatprep.subr.mxu0 0.0
      %456 = vmatpush1.msra.mxu0 0.0
      %457 = vmatprep.subr.mxu0 0.0
      %458 = vmatpush1.msra.mxu0 0.0
      %459 = vmatprep.subr.mxu0 0.0
      %460 = vmatpush1.msra.mxu0 0.0
      %461 = vmatprep.subr.mxu0 0.0
      %462 = vmatpush1.msra.mxu0 0.0
      %463 = vmatprep.subr.mxu0 0.0
      %464 = vmatpush1.msra.mxu0 0.0
      %465 = vmatprep.subr.mxu0 0.0
      %466 = vmatpush1.msra.mxu0 0.0
      %467 = vmatprep.subr.mxu0 0.0
      %468 = vmatpush1.msra.mxu0 0.0
      %469 = vmatprep.subr.mxu0 0.0
      %470 = vmatpush1.msra.mxu0 0.0
      %471 = vmatprep.subr.mxu0 0.0
      %472 = vmatpush1.msra.mxu0 0.0
      %473 = vmatprep.subr.mxu0 0.0
      %474 = vmatpush1.msra.mxu0 0.0
      %475 = vmatprep.subr.mxu0 0.0
      %476 = vmatpush1.msra.mxu0 0.0
      %477 = vmatprep.subr.mxu0 0.0
      %478 = vmatpush1.msra.mxu0 0.0
      %479 = vmatprep.subr.mxu0 0.0
      %480 = vmatpush1.msra.mxu0 0.0
      %481 = vmatprep.subr.mxu0 0.0
      %482 = vmatpush1.msra.mxu0 0.0
      %483 = vmatprep.subr.mxu0 0.0
      %484 = vmatpush1.msra.mxu0 0.0
      %485 = vmatprep.subr.mxu0 0.0
      %486 = vmatpush1.msra.mxu0 0.0
      %487 = vmatprep.subr.mxu0 0.0
      %488 = vmatpush1.msra.mxu0 0.0
      %489 = vmatprep.subr.mxu0 0.0
      %490 = vmatpush1.msra.mxu0 0.0
      %491 = vmatprep.subr.mxu0 0.0
      %492 = vmatpush1.msra.mxu0 0.0
      %493 = vmatprep.subr.mxu0 0.0
      %494 = vmatpush1.msra.mxu0 0.0
      %495 = vmatprep.subr.mxu0 0.0
      %496 = vmatpush1.msra.mxu0 0.0
      %497 = vmatprep.subr.mxu0 0.0
      %498 = vmatpush1.msra.mxu0 0.0
      %499 = vmatprep.subr.mxu0 0.0
      %500 = vmatpush1.msra.mxu0 0.0
      %501 = vmatprep.mubr.f32.mxu0 0.0
      %502 = vmatmul.mubr.f32.gmra.mrb[0].mxu0 %v432
      %v503 = vpop.f32.mrb[0].mxu0
      %v504 = vadd.f32 %v428, %v503
      %v505 = vpop.f32.mrb[0].mxu0
      %506 = vmatprep.mubr.f32.mxu0 0.0
      %507 = vmatmul.mubr.f32.gmra.mrb[0].mxu0 %v435
      %v508 = vpop.f32.mrb[0].mxu0
      %v509 = vadd.f32 %v428, %v508
      %v510 = vpop.f32.mrb[0].mxu0
      %511 = vdwg.mxu0
      %v512 = vmax.f32 %v504, 0.0
      %v513 = vmax.f32 %v509, 0.0
      %s514 = scalar_lea.vmem %s5, %s416
      %v515 = vld [vmem:[%s514] sm:$0xff]
      %v516 = vld [vmem:[%s514 + $0x8] sm:$0xff]
      %v517 = vld [vmem:[%s514 + $0x10] sm:$0xff]
      %v518 = vld [vmem:[%s514 + $0x18] sm:$0xff]
      %s519 = scalar_lea.vmem %s6, %s22
      %v520 = vld [vmem:[%s519] sm:$0x1]
      %v522 = vlaneseq
      %v523 = vshrl.u32 %v522, 7
      %v524 = vsub.s32 0, %v523
      %v525 = vrot.slane %v520, %v524
      %v528 = vsel %vm430, %v512, 0
      %v531 = vsel %vm430, %v513, 0
      %533 = vmatprep.subr.mxu0 0.0
      %534 = vmatpush1.msra.mxu0 %v515
      %535 = vmatprep.subr.mxu0 0.0
      %536 = vmatpush1.msra.mxu0 %v516
      %537 = vmatprep.subr.mxu0 0.0
      %538 = vmatpush1.msra.mxu0 %v517
      %539 = vmatprep.subr.mxu0 0.0
      %540 = vmatpush1.msra.mxu0 %v518
      %541 = vmatprep.subr.mxu0 0.0
      %542 = vmatpush1.msra.mxu0 0.0
      %543 = vmatprep.subr.mxu0 0.0
      %544 = vmatpush1.msra.mxu0 0.0
      %545 = vmatprep.subr.mxu0 0.0
      %546 = vmatpush1.msra.mxu0 0.0
      %547 = vmatprep.subr.mxu0 0.0
      %548 = vmatpush1.msra.mxu0 0.0
      %549 = vmatprep.subr.mxu0 0.0
      %550 = vmatpush1.msra.mxu0 0.0
      %551 = vmatprep.subr.mxu0 0.0
      %552 = vmatpush1.msra.mxu0 0.0
      %553 = vmatprep.subr.mxu0 0.0
      %554 = vmatpush1.msra.mxu0 0.0
      %555 = vmatprep.subr.mxu0 0.0
      %556 = vmatpush1.msra.mxu0 0.0
      %557 = vmatprep.subr.mxu0 0.0
      %558 = vmatpush1.msra.mxu0 0.0
      %559 = vmatprep.subr.mxu0 0.0
      %560 = vmatpush1.msra.mxu0 0.0
      %561 = vmatprep.subr.mxu0 0.0
      %562 = vmatpush1.msra.mxu0 0.0
      %563 = vmatprep.subr.mxu0 0.0
      %564 = vmatpush1.msra.mxu0 0.0
      %565 = vmatprep.subr.mxu0 0.0
      %566 = vmatpush1.msra.mxu0 0.0
      %567 = vmatprep.subr.mxu0 0.0
      %568 = vmatpush1.msra.mxu0 0.0
      %569 = vmatprep.subr.mxu0 0.0
      %570 = vmatpush1.msra.mxu0 0.0
      %571 = vmatprep.subr.mxu0 0.0
      %572 = vmatpush1.msra.mxu0 0.0
      %573 = vmatprep.subr.mxu0 0.0
      %574 = vmatpush1.msra.mxu0 0.0
      %575 = vmatprep.subr.mxu0 0.0
      %576 = vmatpush1.msra.mxu0 0.0
      %577 = vmatprep.subr.mxu0 0.0
      %578 = vmatpush1.msra.mxu0 0.0
      %579 = vmatprep.subr.mxu0 0.0
      %580 = vmatpush1.msra.mxu0 0.0
      %581 = vmatprep.subr.mxu0 0.0
      %582 = vmatpush1.msra.mxu0 0.0
      %583 = vmatprep.subr.mxu0 0.0
      %584 = vmatpush1.msra.mxu0 0.0
      %585 = vmatprep.subr.mxu0 0.0
      %586 = vmatpush1.msra.mxu0 0.0
      %587 = vmatprep.subr.mxu0 0.0
      %588 = vmatpush1.msra.mxu0 0.0
      %589 = vmatprep.subr.mxu0 0.0
      %590 = vmatpush1.msra.mxu0 0.0
      %591 = vmatprep.subr.mxu0 0.0
      %592 = vmatpush1.msra.mxu0 0.0
      %593 = vmatprep.subr.mxu0 0.0
      %594 = vmatpush1.msra.mxu0 0.0
      %595 = vmatprep.subr.mxu0 0.0
      %596 = vmatpush1.msra.mxu0 0.0
      %597 = vmatprep.mubr.f32.mxu0 0.0
      %598 = vmatmul.mubr.f32.gmra.mrb[0].mxu0 %v528
      %v599 = vpop.f32.mrb[0].mxu0
      %v600 = vadd.f32 %v525, %v599
      %v601 = vpop.f32.mrb[0].mxu0
      %602 = vmatprep.mubr.f32.mxu0 0.0
      %603 = vmatmul.mubr.f32.gmra.mrb[0].mxu0 %v531
      %v604 = vpop.f32.mrb[0].mxu0
      %v605 = vadd.f32 %v525, %v604
      %v606 = vpop.f32.mrb[0].mxu0
      %607 = vdwg.mxu0
      %vm608 = vcmask 64512
      %609 = vst.msk [vmem:[%s316] sm:$0xff] %vm608, %v600
      %610 = vst.msk [vmem:[%s316 + $0x8] sm:$0xff] %vm608, %v605
      %s611 = smul.u32 2, %s23
      %p612 = scmp.lt.s32.totalorder %s22, 3
      %s613 = scalar_select %p612, %s22, 3
      %p614 = scmp.lt.s32.totalorder %s611, 1
      %s615 = scalar_select %p614, %s611, 1
      %s616 = smul.addr %s613, 2
      %s617 = sadd.s32 %s615, %s616
      %s618 = smul.addr %s617, 8
      %s619 = scalar_lea.vmem %s7, %s618
      // Predicated region
      $region49: #{batch_mlp_pallas.1} parent=47 // pred_check
        %p620 = pneg %p204
      $region50: #{batch_mlp_pallas.1} parent=47 // pred_check_branch
        %622 = sbr.rel (%p620) target = $region52
      $region51: #{batch_mlp_pallas.1} parent=47 // pred_region
        %s623 = smul.u32 2, %s23
      $region52: #{batch_mlp_pallas.1} parent=47 // pred_fallthru
        _
    $region48: #{batch_mlp_pallas.1} parent=5 // pred_fallthru
      _
    %p624 = scmp.le.s32.totalorder 2, %s13
    // Predicated region
    $region53: #{batch_mlp_pallas.1} parent=5 // pred_check
      %p625 = pneg %p624
    $region54: #{batch_mlp_pallas.1} parent=5 // pred_check_branch
      %627 = sbr.rel (%p625) target = $region56
    $region55: #{batch_mlp_pallas.1} parent=5 // pred_region
      %s628 = ssub.s32 %s13, 2
      // Predicated region
      $region57: #{batch_mlp_pallas.1} parent=55 // pred_check
        %p629 = pneg %p210
      $region58: #{batch_mlp_pallas.1} parent=55 // pred_check_branch
        %631 = sbr.rel (%p629) target = $region60
      $region59: #{batch_mlp_pallas.1} parent=55 // pred_region
        %s632 = smul.u32 2, %s25
        %p633 = scmp.lt.s32.totalorder %s24, 3
        %s634 = scalar_select %p633, %s24, 3
        %p635 = scmp.lt.s32.totalorder %s632, 1
        %s636 = scalar_select %p635, %s632, 1
        %s637 = smul.addr %s634, 2
        %s638 = sadd.s32 %s636, %s637
        %s639 = smul.addr %s638, 8
        %s640 = scalar_lea.vmem %s7, %s639
      $region60: #{batch_mlp_pallas.1} parent=55 // pred_fallthru
        _
    $region56: #{batch_mlp_pallas.1} parent=5 // pred_fallthru
      _
  $region6: #{batch_mlp_pallas.1} parent=0 // loop_footer
    %s17 = sadd.s32 1, %s13
  $region7: #{batch_mlp_pallas.1} parent=0 // loop_footer_branch
    %12 = sbr.rel target = $region3
  $region8: #{batch_mlp_pallas.1} parent=0 // loop_exit
    _

</llo_original>
